<compile_context>
chip_gen: v6e
topology: v6e:2x2x1
jax: 0.10.0
libtpu: 0.0.40
codegen_flags: <defaults>
</compile_context>

<pallas_src>
import functools

import jax
import jax.numpy as jnp
from jax.experimental import pallas as pl
from jax.experimental.pallas import tpu as pltpu

_LANE = 128
_MXU_PACK = 16  # bf16 MXU LHS packs 16 rows per vreg


def _round_up(n, m):
    return ((n + m - 1) // m) * m


def _supports_bf16_eltwise():
    """bf16 VPU/EUP exists on v6e / v7x but not on v5e or older."""
    try:
        kind = jax.devices()[0].device_kind.lower()
    except Exception:
        return False
    return any(tag in kind for tag in ("v6", "v7", "tpu7"))


# ---------------------------------------------------------------------------
# Kernel
# ---------------------------------------------------------------------------
def _fc_kernel(nonlinearity, n_layers, bf16_act, *refs):
    # refs layout:
    #   [0] x tile           (TB, obs_dim)  f32   (streamed over the batch grid)
    #   [1] in_shift         (1, obs_dim)   f32   (VMEM-resident, Buffered(1))
    #   [2] inv_in_scale     (1, obs_dim)   f32   (precomputed 1/(scale+1e-8))
    #   [3] out_shift        (1, act_dim)   f32
    #   [4] out_scale        (1, act_dim)   f32
    #   [5 .. 5+2*n_layers)  W_i bf16 / b_i f32  (hidden widths padded to 128)
    #   [-1] out tile        (TB, act_dim)  f32
    x_ref = refs[0]
    out_ref = refs[-1]
    wb_refs = refs[5:-1]

    in_shift = refs[1][...]
    inv_in_scale = refs[2][...]
    out_shift = refs[3][...]
    out_scale = refs[4][...]

    if nonlinearity == "tanh":
        act = jnp.tanh
    else:
        act = lambda v: jnp.maximum(v, 0.0)

    # Input normalization: (x - shift) * 1/(scale + 1e-8); f32 on the VPU.
    h = (x_ref[...] - in_shift) * inv_in_scale

    for i in range(n_layers):
        w = wb_refs[2 * i][...]        # bf16 (in_p, out_p)
        b = wb_refs[2 * i + 1][...]    # f32  (1, out_p)
        lhs = h if h.dtype == jnp.bfloat16 else h.astype(jnp.bfloat16)
        # bf16 operands on the MXU, f32 accumulation.
        h = jnp.dot(lhs, w, preferred_element_type=jnp.float32) + b
        if i < n_layers - 1:
            if bf16_act:
                # v6e/v7x: bf16 EUP (~2x f32 rate); result is already bf16
                # for the next MXU pass (drops a VPU cast per layer).
                h = act(h.astype(jnp.bfloat16))
            else:
                h = act(h)  # v5e: keep tanh/relu in f32 (no bf16 VPU/EUP)

    # Output transformation in f32: out * out_scale + out_shift.
    out_ref[...] = h * out_scale + out_shift


# ---------------------------------------------------------------------------
# One-time parameter preparation (call once, reuse across forward calls)
# ---------------------------------------------------------------------------
def prepare_fc_params(params, in_shift=None, in_scale=None,
                      out_shift=None, out_scale=None):
    """Pads hidden widths to multiples of 128, casts weights to bf16, and
    precomputes the input-scale reciprocal. obs_dim / act_dim stay unpadded
    (full-dim blocks are exempt from the (8,128) rule), so the streamed x and
    output tiles carry no padding traffic."""
    obs_dim = params[0][0].shape[0]
    act_dim = params[-1][0].shape[1]
    n_layers = len(params)
    dims = [obs_dim] + [w.shape[1] for w, _ in params]
    dims_p = [dims[0]] + [_round_up(d, _LANE) for d in dims[1:-1]] + [dims[-1]]

    def _row(v, n, fill):
        out = jnp.full((1, n), fill, jnp.float32)
        if v is None:
            return out
        v = jnp.asarray(v, jnp.float32).reshape(-1)
        return out.at[0, :v.shape[0]].set(v)

    in_shift_r = _row(in_shift, obs_dim, 0.0)
    in_scale_r = _row(in_scale, obs_dim, 1.0)
    inv_in_scale_r = 1.0 / (in_scale_r + 1e-8)
    out_shift_r = _row(out_shift, act_dim, 0.0)
    out_scale_r = _row(out_scale, act_dim, 1.0)

    weights, biases = [], []
    for li, (w, b) in enumerate(params):
        in_p, out_p = dims_p[li], dims_p[li + 1]
        w_p = jnp.zeros((in_p, out_p), jnp.bfloat16)
        w_p = w_p.at[:w.shape[0], :w.shape[1]].set(jnp.asarray(w, jnp.bfloat16))
        b_flat = jnp.asarray(b, jnp.float32).reshape(-1)
        b_p = jnp.zeros((1, out_p), jnp.float32).at[0, :b_flat.shape[0]].set(b_flat)
        weights.append(w_p)
        biases.append(b_p)

    return dict(obs_dim=obs_dim, act_dim=act_dim, n_layers=n_layers,
                dims_p=tuple(dims_p),
                in_shift=in_shift_r, inv_in_scale=inv_in_scale_r,
                out_shift=out_shift_r, out_scale=out_scale_r,
                weights=weights, biases=biases)


# ---------------------------------------------------------------------------
# Forward wrapper
# ---------------------------------------------------------------------------
def fc_network_forward(x, prep, nonlinearity="tanh", batch_tile=512,
                       bf16_act=None):
    obs_dim, act_dim = prep["obs_dim"], prep["act_dim"]
    n_layers, dims_p = prep["n_layers"], prep["dims_p"]
    batch = x.shape[0]
    assert x.shape[1] == obs_dim

    if bf16_act is None:
        bf16_act = _supports_bf16_eltwise()

    # Batch tiling: multiples of 16 (bf16 MXU LHS packing). For batches >= 256
    # that fit one tile, split into 2 grid steps so the "parallel" grid axis
    # can occupy both v7x TensorCores.
    batch_tile = max(_MXU_PACK, _round_up(int(batch_tile), _MXU_PACK))
    if batch <= batch_tile:
        if batch >= 256:
            tb = _round_up(-(-batch // 2), _MXU_PACK)
        else:
            tb = _round_up(batch, _MXU_PACK)
    else:
        tb = batch_tile
    batch_p = _round_up(batch, tb)
    grid = (batch_p // tb,)

    x = x.astype(jnp.float32)
    if batch_p != batch:
        x = jnp.pad(x, ((0, batch_p - batch), (0, 0)))  # batch-dim only

    # Constant index_map -> fetched once, single-buffered (no 2x VMEM).
    resident = pl.Buffered(1)

    inputs = [x, prep["in_shift"], prep["inv_in_scale"],
              prep["out_shift"], prep["out_scale"]]
    in_specs = [
        pl.BlockSpec((tb, obs_dim), lambda i: (i, 0)),  # streamed batch tiles
        pl.BlockSpec((1, obs_dim), lambda i: (0, 0), pipeline_mode=resident),
        pl.BlockSpec((1, obs_dim), lambda i: (0, 0), pipeline_mode=resident),
        pl.BlockSpec((1, act_dim), lambda i: (0, 0), pipeline_mode=resident),
        pl.BlockSpec((1, act_dim), lambda i: (0, 0), pipeline_mode=resident),
    ]

    flops = 0
    transcendentals = 0
    bytes_accessed = batch_p * obs_dim * 4 + batch_p * act_dim * 4
    resident_bytes = 0
    for li in range(n_layers):
        in_p, out_p = dims_p[li], dims_p[li + 1]
        inputs.append(prep["weights"][li])
        inputs.append(prep["biases"][li])
        in_specs.append(
            pl.BlockSpec((in_p, out_p), lambda i: (0, 0), pipeline_mode=resident))
        in_specs.append(
            pl.BlockSpec((1, out_p), lambda i: (0, 0), pipeline_mode=resident))
        flops += 2 * batch_p * in_p * out_p
        if li < n_layers - 1 and nonlinearity == "tanh":
            transcendentals += batch_p * out_p
        layer_bytes = in_p * out_p * 2 + out_p * 4
        bytes_accessed += layer_bytes
        resident_bytes += layer_bytes

    # TODO(synk): when resident bf16 weights exceed ~20 MiB (v7x has only
    # 64 MiB physical VMEM), add an N/K-tiled weight-streaming grid axis
    # instead of keeping the whole network VMEM-resident.

    # Explicit VMEM budget: resident weights + double-buffered x/out tiles +
    # per-layer intermediates, with headroom (v5e scoped default is 16 MiB).
    max_w = max(dims_p)
    stream_bytes = 2 * (tb * obs_dim * 4 + tb * act_dim * 4)
    interm_bytes = 4 * tb * max_w * 4
    vmem_limit = min(
        max(resident_bytes + stream_bytes + interm_bytes + (4 << 20), 16 << 20),
        64 << 20)

    kernel = functools.partial(_fc_kernel, nonlinearity, n_layers, bf16_act)

    out = pl.pallas_call(
        kernel,
        out_shape=jax.ShapeDtypeStruct((batch_p, act_dim), jnp.float32),
        grid=grid,
        in_specs=in_specs,
        out_specs=pl.BlockSpec((tb, act_dim), lambda i: (i, 0)),
        compiler_params=pltpu.CompilerParams(
            dimension_semantics=("parallel",),
            vmem_limit_bytes=vmem_limit),
        cost_estimate=pl.CostEstimate(
            flops=flops, transcendentals=transcendentals,
            bytes_accessed=bytes_accessed),
    )(*inputs)

    if batch_p != batch:
        out = out[:batch]
    return out


# ---------------------------------------------------------------------------
# References + demo
# ---------------------------------------------------------------------------
def _init_linear(key, fan_in, fan_out):
    # Mimic torch.nn.Linear default init: U(-1/sqrt(fan_in), 1/sqrt(fan_in)).
    kw, kb = jax.random.split(key)
    bound = 1.0 / jnp.sqrt(fan_in)
    w = jax.random.uniform(kw, (fan_in, fan_out), jnp.float32, -bound, bound)
    b = jax.random.uniform(kb, (fan_out,), jnp.float32, -bound, bound)
    return w, b


def _reference_forward_f32(x, params, in_shift, in_scale, out_shift, out_scale,
                           nonlinearity="tanh"):
    act = jnp.tanh if nonlinearity == "tanh" else (lambda v: jnp.maximum(v, 0.0))
    h = (x - in_shift) / (in_scale + 1e-8)
    for i, (w, b) in enumerate(params):
        h = h @ w + b
        if i < len(params) - 1:
            h = act(h)
    return h * out_scale + out_shift


def _reference_forward_kernel_numerics(x, params, in_shift, in_scale, out_shift,
                                       out_scale, nonlinearity, bf16_act):
    # Mirrors the kernel numerics: bf16 MXU operands, f32 accumulation,
    # bf16 or f32 hidden nonlinearity depending on the chip flag.
    act = jnp.tanh if nonlinearity == "tanh" else (lambda v: jnp.maximum(v, 0.0))
    h = (x - in_shift) * (1.0 / (in_scale + 1e-8))
    for i, (w, b) in enumerate(params):
        lhs = h if h.dtype == jnp.bfloat16 else h.astype(jnp.bfloat16)
        h = jnp.dot(lhs, w.astype(jnp.bfloat16),
                    preferred_element_type=jnp.float32) + b
        if i < len(params) - 1:
            h = act(h.astype(jnp.bfloat16)) if bf16_act else act(h)
    return (h * out_scale + out_shift).astype(jnp.float32)


if __name__ == "__main__":
    obs_dim = 16
    act_dim = 8
    hidden_sizes = (64, 64)
    batch = 32
    layer_sizes = (obs_dim,) + hidden_sizes + (act_dim,)

    key = jax.random.PRNGKey(0)
    keys = jax.random.split(key, len(layer_sizes))  # last key for input x

    params = [_init_linear(keys[i], layer_sizes[i], layer_sizes[i + 1])
              for i in range(len(layer_sizes) - 1)]
    x = jax.random.normal(keys[-1], (batch, obs_dim), jnp.float32)

    # Default transformations (in_shift=None, etc. -> zeros / ones).
    in_shift = jnp.zeros((obs_dim,), jnp.float32)
    in_scale = jnp.ones((obs_dim,), jnp.float32)
    out_shift = jnp.zeros((act_dim,), jnp.float32)
    out_scale = jnp.ones((act_dim,), jnp.float32)

    bf16_act = _supports_bf16_eltwise()

    # One-time parameter prep (amortized across all forward calls).
    prep = prepare_fc_params(params, in_shift, in_scale, out_shift, out_scale)

    for nonlin in ("tanh", "relu"):
        out = fc_network_forward(x, prep, nonlinearity=nonlin, bf16_act=bf16_act)
        out = jax.block_until_ready(out)
        assert out.shape == (batch, act_dim)

        # Tight-ish check vs a reference with matching numerics.
        ref_kn = _reference_forward_kernel_numerics(
            x, params, in_shift, in_scale, out_shift, out_scale, nonlin, bf16_act)
        assert jnp.allclose(out, ref_kn, atol=1e-2, rtol=1e-2), (
            f"{nonlin}: mismatch vs kernel-numerics reference")

        # Loose semantic check vs the pure-f32 PyTorch-equivalent reference.
        ref_f32 = _reference_forward_f32(x, params, in_shift, in_scale,
                                         out_shift, out_scale, nonlin)
        assert jnp.allclose(out, ref_f32, atol=3e-2, rtol=3e-2), (
            f"{nonlin}: mismatch vs f32 reference")

    print("KERNEL_OK")
</pallas_src>

<mosaic_0001>
module attributes {stable_mosaic.version = 11 : i64} {
  func.func @_fc_kernel(%arg0: i32, %arg1: memref<32x16xf32, #tpu.memory_space<vmem>>, %arg2: memref<1x16xf32, #tpu.memory_space<vmem>>, %arg3: memref<1x16xf32, #tpu.memory_space<vmem>>, %arg4: memref<1x8xf32, #tpu.memory_space<vmem>>, %arg5: memref<1x8xf32, #tpu.memory_space<vmem>>, %arg6: memref<16x128xbf16, #tpu.memory_space<vmem>>, %arg7: memref<1x128xf32, #tpu.memory_space<vmem>>, %arg8: memref<128x128xbf16, #tpu.memory_space<vmem>>, %arg9: memref<1x128xf32, #tpu.memory_space<vmem>>, %arg10: memref<128x8xbf16, #tpu.memory_space<vmem>>, %arg11: memref<1x8xf32, #tpu.memory_space<vmem>>, %arg12: memref<32x8xf32, #tpu.memory_space<vmem>>) attributes {dimension_semantics = [#tpu.dimension_semantics<parallel>], iteration_bounds = array<i64: 1>, scalar_prefetch = 0 : i64, scratch_operands = 0 : i64, tpu.core_type = #tpu.core_type<tc>, window_params = [{transform_indices = @transform_0, window_bounds = array<i64: 32, 16>}, {pipeline_mode = #tpu.pipeline_mode<synchronous>, transform_indices = @transform_1, window_bounds = array<i64: 1, 16>}, {pipeline_mode = #tpu.pipeline_mode<synchronous>, transform_indices = @transform_2, window_bounds = array<i64: 1, 16>}, {pipeline_mode = #tpu.pipeline_mode<synchronous>, transform_indices = @transform_3, window_bounds = array<i64: 1, 8>}, {pipeline_mode = #tpu.pipeline_mode<synchronous>, transform_indices = @transform_4, window_bounds = array<i64: 1, 8>}, {pipeline_mode = #tpu.pipeline_mode<synchronous>, transform_indices = @transform_5, window_bounds = array<i64: 16, 128>}, {pipeline_mode = #tpu.pipeline_mode<synchronous>, transform_indices = @transform_6, window_bounds = array<i64: 1, 128>}, {pipeline_mode = #tpu.pipeline_mode<synchronous>, transform_indices = @transform_7, window_bounds = array<i64: 128, 128>}, {pipeline_mode = #tpu.pipeline_mode<synchronous>, transform_indices = @transform_8, window_bounds = array<i64: 1, 128>}, {pipeline_mode = #tpu.pipeline_mode<synchronous>, transform_indices = @transform_9, window_bounds = array<i64: 128, 8>}, {pipeline_mode = #tpu.pipeline_mode<synchronous>, transform_indices = @transform_10, window_bounds = array<i64: 1, 8>}, {transform_indices = @transform_11, window_bounds = array<i64: 32, 8>}]} {
    %c0 = arith.constant 0 : index
    %c0_0 = arith.constant 0 : index
    %0 = vector.load %arg2[%c0, %c0_0] : memref<1x16xf32, #tpu.memory_space<vmem>>, vector<1x16xf32>
    %c0_1 = arith.constant 0 : index
    %c0_2 = arith.constant 0 : index
    %1 = vector.load %arg3[%c0_1, %c0_2] : memref<1x16xf32, #tpu.memory_space<vmem>>, vector<1x16xf32>
    %c0_3 = arith.constant 0 : index
    %c0_4 = arith.constant 0 : index
    %2 = vector.load %arg4[%c0_3, %c0_4] : memref<1x8xf32, #tpu.memory_space<vmem>>, vector<1x8xf32>
    %c0_5 = arith.constant 0 : index
    %c0_6 = arith.constant 0 : index
    %3 = vector.load %arg5[%c0_5, %c0_6] : memref<1x8xf32, #tpu.memory_space<vmem>>, vector<1x8xf32>
    %c0_7 = arith.constant 0 : index
    %c0_8 = arith.constant 0 : index
    %4 = vector.load %arg1[%c0_7, %c0_8] : memref<32x16xf32, #tpu.memory_space<vmem>>, vector<32x16xf32>
    %5 = vector.broadcast %0 : vector<1x16xf32> to vector<32x16xf32>
    %6 = arith.subf %4, %5 : vector<32x16xf32>
    %7 = vector.broadcast %1 : vector<1x16xf32> to vector<32x16xf32>
    %8 = arith.mulf %6, %7 : vector<32x16xf32>
    %c0_9 = arith.constant 0 : index
    %c0_10 = arith.constant 0 : index
    %9 = vector.load %arg6[%c0_9, %c0_10] : memref<16x128xbf16, #tpu.memory_space<vmem>>, vector<16x128xbf16>
    %c0_11 = arith.constant 0 : index
    %c0_12 = arith.constant 0 : index
    %10 = vector.load %arg7[%c0_11, %c0_12] : memref<1x128xf32, #tpu.memory_space<vmem>>, vector<1x128xf32>
    %11 = arith.truncf %8 : vector<32x16xf32> to vector<32x16xbf16>
    %cst = arith.constant dense<0.000000e+00> : vector<32x128xf32>
    %12 = tpu.matmul %11, %9, %cst {dimension_numbers = #tpu.dot_dimension_numbers<[1], [0], [0], [1], [0, 0, 1, 1], [], []>} : vector<32x16xbf16>, vector<16x128xbf16>, vector<32x128xf32> -> vector<32x128xf32>
    %13 = vector.broadcast %10 : vector<1x128xf32> to vector<32x128xf32>
    %14 = arith.addf %12, %13 : vector<32x128xf32>
    %15 = math.tanh %14 : vector<32x128xf32>
    %c0_13 = arith.constant 0 : index
    %c0_14 = arith.constant 0 : index
    %16 = vector.load %arg8[%c0_13, %c0_14] : memref<128x128xbf16, #tpu.memory_space<vmem>>, vector<128x128xbf16>
    %c0_15 = arith.constant 0 : index
    %c0_16 = arith.constant 0 : index
    %17 = vector.load %arg9[%c0_15, %c0_16] : memref<1x128xf32, #tpu.memory_space<vmem>>, vector<1x128xf32>
    %18 = arith.truncf %15 : vector<32x128xf32> to vector<32x128xbf16>
    %cst_17 = arith.constant dense<0.000000e+00> : vector<32x128xf32>
    %19 = tpu.matmul %18, %16, %cst_17 {dimension_numbers = #tpu.dot_dimension_numbers<[1], [0], [0], [1], [0, 0, 1, 1], [], []>} : vector<32x128xbf16>, vector<128x128xbf16>, vector<32x128xf32> -> vector<32x128xf32>
    %20 = vector.broadcast %17 : vector<1x128xf32> to vector<32x128xf32>
    %21 = arith.addf %19, %20 : vector<32x128xf32>
    %22 = math.tanh %21 : vector<32x128xf32>
    %c0_18 = arith.constant 0 : index
    %c0_19 = arith.constant 0 : index
    %23 = vector.load %arg10[%c0_18, %c0_19] : memref<128x8xbf16, #tpu.memory_space<vmem>>, vector<128x8xbf16>
    %c0_20 = arith.constant 0 : index
    %c0_21 = arith.constant 0 : index
    %24 = vector.load %arg11[%c0_20, %c0_21] : memref<1x8xf32, #tpu.memory_space<vmem>>, vector<1x8xf32>
    %25 = arith.truncf %22 : vector<32x128xf32> to vector<32x128xbf16>
    %cst_22 = arith.constant dense<0.000000e+00> : vector<32x8xf32>
    %26 = tpu.matmul %25, %23, %cst_22 {dimension_numbers = #tpu.dot_dimension_numbers<[1], [0], [0], [1], [0, 0, 1, 1], [], []>} : vector<32x128xbf16>, vector<128x8xbf16>, vector<32x8xf32> -> vector<32x8xf32>
    %27 = vector.broadcast %24 : vector<1x8xf32> to vector<32x8xf32>
    %28 = arith.addf %26, %27 : vector<32x8xf32>
    %29 = vector.broadcast %3 : vector<1x8xf32> to vector<32x8xf32>
    %30 = arith.mulf %28, %29 : vector<32x8xf32>
    %31 = vector.broadcast %2 : vector<1x8xf32> to vector<32x8xf32>
    %32 = arith.addf %30, %31 : vector<32x8xf32>
    %c0_23 = arith.constant 0 : index
    %c0_24 = arith.constant 0 : index
    %33 = vector.load %arg12[%c0_23, %c0_24] : memref<32x8xf32, #tpu.memory_space<vmem>>, vector<32x8xf32>
    tpu.vector_store %arg12[%c0_23, %c0_24], %32 {strides = array<i32>} : memref<32x8xf32, #tpu.memory_space<vmem>>, vector<32x8xf32>,
    return
  }
  func.func @transform_0(%arg0: i32) -> (i32, i32) {
    %c0_i32 = arith.constant 0 : i32
    %c0_i32_0 = arith.constant 0 : i32
    return %arg0, %c0_i32 : i32, i32
  }
  func.func @transform_1(%arg0: i32) -> (i32, i32) {
    %c0_i32 = arith.constant 0 : i32
    %c0_i32_0 = arith.constant 0 : i32
    %c0_i32_1 = arith.constant 0 : i32
    return %c0_i32, %c0_i32_0 : i32, i32
  }
  func.func @transform_2(%arg0: i32) -> (i32, i32) {
    %c0_i32 = arith.constant 0 : i32
    %c0_i32_0 = arith.constant 0 : i32
    %c0_i32_1 = arith.constant 0 : i32
    return %c0_i32, %c0_i32_0 : i32, i32
  }
  func.func @transform_3(%arg0: i32) -> (i32, i32) {
    %c0_i32 = arith.constant 0 : i32
    %c0_i32_0 = arith.constant 0 : i32
    %c0_i32_1 = arith.constant 0 : i32
    return %c0_i32, %c0_i32_0 : i32, i32
  }
  func.func @transform_4(%arg0: i32) -> (i32, i32) {
    %c0_i32 = arith.constant 0 : i32
    %c0_i32_0 = arith.constant 0 : i32
    %c0_i32_1 = arith.constant 0 : i32
    return %c0_i32, %c0_i32_0 : i32, i32
  }
  func.func @transform_5(%arg0: i32) -> (i32, i32) {
    %c0_i32 = arith.constant 0 : i32
    %c0_i32_0 = arith.constant 0 : i32
    %c0_i32_1 = arith.constant 0 : i32
    return %c0_i32, %c0_i32_0 : i32, i32
  }
  func.func @transform_6(%arg0: i32) -> (i32, i32) {
    %c0_i32 = arith.constant 0 : i32
    %c0_i32_0 = arith.constant 0 : i32
    %c0_i32_1 = arith.constant 0 : i32
    return %c0_i32, %c0_i32_0 : i32, i32
  }
  func.func @transform_7(%arg0: i32) -> (i32, i32) {
    %c0_i32 = arith.constant 0 : i32
    %c0_i32_0 = arith.constant 0 : i32
    %c0_i32_1 = arith.constant 0 : i32
    return %c0_i32, %c0_i32_0 : i32, i32
  }
  func.func @transform_8(%arg0: i32) -> (i32, i32) {
    %c0_i32 = arith.constant 0 : i32
    %c0_i32_0 = arith.constant 0 : i32
    %c0_i32_1 = arith.constant 0 : i32
    return %c0_i32, %c0_i32_0 : i32, i32
  }
  func.func @transform_9(%arg0: i32) -> (i32, i32) {
    %c0_i32 = arith.constant 0 : i32
    %c0_i32_0 = arith.constant 0 : i32
    %c0_i32_1 = arith.constant 0 : i32
    return %c0_i32, %c0_i32_0 : i32, i32
  }
  func.func @transform_10(%arg0: i32) -> (i32, i32) {
    %c0_i32 = arith.constant 0 : i32
    %c0_i32_0 = arith.constant 0 : i32
    %c0_i32_1 = arith.constant 0 : i32
    return %c0_i32, %c0_i32_0 : i32, i32
  }
  func.func @transform_11(%arg0: i32) -> (i32, i32) {
    %c0_i32 = arith.constant 0 : i32
    %c0_i32_0 = arith.constant 0 : i32
    return %arg0, %c0_i32 : i32, i32
  }
}

</mosaic_0001>

<llo_original>
// kernel: tpu_custom_call.1
$region0: #{tpu_custom_call.1}
  #allocation0 [shape = 'u32[]', space=smem, size = 0x4, offset = 0x4, fixed_abs, tag = 'smem constant byte address 0x4 - core index']
  #allocation1 [shape = 'u32[144,128]{1,0:T(1,128)}', space=vmem, size = 0x12000, scoped, tag = 'internal scratch']
  %s0 = inlined_call_operand.vmem [shape: f32[32,16], index: 0, kind: input, shape index: {}]
  %s1 = inlined_call_operand.vmem [shape: f32[1,16], index: 1, kind: input, shape index: {}]
  %s2 = inlined_call_operand.vmem [shape: f32[1,16], index: 2, kind: input, shape index: {}]
  %s3 = inlined_call_operand.vmem [shape: f32[1,8], index: 3, kind: input, shape index: {}]
  %s4 = inlined_call_operand.vmem [shape: f32[1,8], index: 4, kind: input, shape index: {}]
  %s5 = inlined_call_operand.vmem [shape: bf16[16,128], index: 5, kind: input, shape index: {}]
  %s6 = inlined_call_operand.vmem [shape: f32[1,128], index: 6, kind: input, shape index: {}]
  %s7 = inlined_call_operand.vmem [shape: bf16[128,128], index: 7, kind: input, shape index: {}]
  %s8 = inlined_call_operand.vmem [shape: f32[1,128], index: 8, kind: input, shape index: {}]
  %s9 = inlined_call_operand.vmem [shape: bf16[128,8], index: 9, kind: input, shape index: {}]
  %s10 = inlined_call_operand.vmem [shape: f32[1,8], index: 10, kind: input, shape index: {}]
  %s11 = inlined_call_operand.vmem [shape: f32[32,8], index: 11, kind: output, shape index: {}]
  %s12 = sld [smem:[#allocation0]]
  $region54: #{tpu_custom_call.1} parent=0
    _
  %s14 = ssub.s32 1, %s12
  %s15 = scalar_select 0, %s14, %s12
  // Predicated region
  $region2: #{tpu_custom_call.1} parent=0 // pred_check
    _
  $region3: #{tpu_custom_call.1} parent=0 // pred_check_branch
    %17 = sbr.rel (0) target = $region5
  $region4: #{tpu_custom_call.1} parent=0 // pred_region
    _
  $region5: #{tpu_custom_call.1} parent=0 // pred_fallthru
    _
  // Predicated region
  $region6: #{tpu_custom_call.1} parent=0 // pred_check
    _
  $region7: #{tpu_custom_call.1} parent=0 // pred_check_branch
    %19 = sbr.rel (0) target = $region9
  $region8: #{tpu_custom_call.1} parent=0 // pred_region
    _
  $region9: #{tpu_custom_call.1} parent=0 // pred_fallthru
    _
  // Predicated region
  $region10: #{tpu_custom_call.1} parent=0 // pred_check
    _
  $region11: #{tpu_custom_call.1} parent=0 // pred_check_branch
    %21 = sbr.rel (0) target = $region13
  $region12: #{tpu_custom_call.1} parent=0 // pred_region
    _
  $region13: #{tpu_custom_call.1} parent=0 // pred_fallthru
    _
  // Predicated region
  $region14: #{tpu_custom_call.1} parent=0 // pred_check
    _
  $region15: #{tpu_custom_call.1} parent=0 // pred_check_branch
    %23 = sbr.rel (0) target = $region17
  $region16: #{tpu_custom_call.1} parent=0 // pred_region
    _
  $region17: #{tpu_custom_call.1} parent=0 // pred_fallthru
    _
  // Predicated region
  $region18: #{tpu_custom_call.1} parent=0 // pred_check
    _
  $region19: #{tpu_custom_call.1} parent=0 // pred_check_branch
    %25 = sbr.rel (0) target = $region21
  $region20: #{tpu_custom_call.1} parent=0 // pred_region
    _
  $region21: #{tpu_custom_call.1} parent=0 // pred_fallthru
    _
  // Predicated region
  $region22: #{tpu_custom_call.1} parent=0 // pred_check
    _
  $region23: #{tpu_custom_call.1} parent=0 // pred_check_branch
    %27 = sbr.rel (0) target = $region25
  $region24: #{tpu_custom_call.1} parent=0 // pred_region
    _
  $region25: #{tpu_custom_call.1} parent=0 // pred_fallthru
    _
  // Predicated region
  $region26: #{tpu_custom_call.1} parent=0 // pred_check
    _
  $region27: #{tpu_custom_call.1} parent=0 // pred_check_branch
    %29 = sbr.rel (0) target = $region29
  $region28: #{tpu_custom_call.1} parent=0 // pred_region
    _
  $region29: #{tpu_custom_call.1} parent=0 // pred_fallthru
    _
  // Predicated region
  $region30: #{tpu_custom_call.1} parent=0 // pred_check
    _
  $region31: #{tpu_custom_call.1} parent=0 // pred_check_branch
    %31 = sbr.rel (0) target = $region33
  $region32: #{tpu_custom_call.1} parent=0 // pred_region
    _
  $region33: #{tpu_custom_call.1} parent=0 // pred_fallthru
    _
  // Predicated region
  $region34: #{tpu_custom_call.1} parent=0 // pred_check
    _
  $region35: #{tpu_custom_call.1} parent=0 // pred_check_branch
    %33 = sbr.rel (0) target = $region37
  $region36: #{tpu_custom_call.1} parent=0 // pred_region
    _
  $region37: #{tpu_custom_call.1} parent=0 // pred_fallthru
    _
  // Predicated region
  $region38: #{tpu_custom_call.1} parent=0 // pred_check
    _
  $region39: #{tpu_custom_call.1} parent=0 // pred_check_branch
    %35 = sbr.rel (0) target = $region41
  $region40: #{tpu_custom_call.1} parent=0 // pred_region
    _
  $region41: #{tpu_custom_call.1} parent=0 // pred_fallthru
    _
  // Predicated region
  $region42: #{tpu_custom_call.1} parent=0 // pred_check
    _
  $region43: #{tpu_custom_call.1} parent=0 // pred_check_branch
    %37 = sbr.rel (0) target = $region45
  $region44: #{tpu_custom_call.1} parent=0 // pred_region
    _
  $region45: #{tpu_custom_call.1} parent=0 // pred_fallthru
    _
  %v39 = vld [vmem:[%s1] sm:$0x1]
  %v40 = vld [vmem:[%s2] sm:$0x1]
  %v41 = vld [vmem:[%s3] sm:$0x1]
  %v42 = vld [vmem:[%s4] sm:$0x1]
  %v43 = vld [vmem:[%s0] sm:$0xff]
  %v44 = vld [vmem:[%s0 + $0x8] sm:$0xff]
  %v45 = vld [vmem:[%s0 + $0x10] sm:$0xff]
  %v46 = vld [vmem:[%s0 + $0x18] sm:$0xff]
  %v48 = vlaneseq
  %v49 = vshrl.u32 %v48, 7
  %v50 = vsub.s32 0, %v49
  %v51 = vrot.slane %v39, %v50
  %v53 = vsub.f32 %v43, %v51
  %v54 = vsub.f32 %v44, %v51
  %v55 = vsub.f32 %v45, %v51
  %v56 = vsub.f32 %v46, %v51
  %v58 = vlaneseq
  %v59 = vshrl.u32 %v58, 7
  %v60 = vsub.s32 0, %v59
  %v61 = vrot.slane %v40, %v60
  %v63 = vmul.f32 %v53, %v61
  %v64 = vmul.f32 %v54, %v61
  %v65 = vmul.f32 %v55, %v61
  %v66 = vmul.f32 %v56, %v61
  %v67 = vld [vmem:[%s5] sm:$0xf]
  %v68 = vld [vmem:[%s5 + $0x4] sm:$0xf]
  %v69 = vld [vmem:[%s6] sm:$0x1]
  %v70 = vpack.c.bf16 %v64, %v63
  %v71 = vpack.c.bf16 %v66, %v65
  %v73 = vlaneseq
  %v74 = vshrl.u32 %v73, 7
  %v75 = vsub.s32 0, %v74
  %v76 = vrot.slane %v69, %v75
  %v80 = vunpack.c.l.b16 %v67
  %v81 = vunpack.c.l.b16 %v68
  %v82 = vpack.c.b16 %v81, %v80
  %vm84 = vcmask 130048
  %v86 = vsel %vm84, %v70, 0
  %v89 = vsel %vm84, %v71, 0
  %91 = vmatprep.subr.bf16.mxu0 0
  %92 = vmatpush1.bf16.msra.mxu0 0
  %93 = vmatprep.subr.bf16.mxu0 0
  %94 = vmatpush1.bf16.msra.mxu0 0
  %95 = vmatprep.subr.bf16.mxu0 0
  %96 = vmatpush1.bf16.msra.mxu0 0
  %97 = vmatprep.subr.bf16.mxu0 0
  %98 = vmatpush1.bf16.msra.mxu0 0
  %99 = vmatprep.subr.bf16.mxu0 0
  %100 = vmatpush1.bf16.msra.mxu0 0
  %101 = vmatprep.subr.bf16.mxu0 0
  %102 = vmatpush1.bf16.msra.mxu0 0
  %103 = vmatprep.subr.bf16.mxu0 0
  %104 = vmatpush1.bf16.msra.mxu0 0
  %105 = vmatprep.subr.bf16.mxu0 0
  %106 = vmatpush1.bf16.msra.mxu0 %v82
  %107 = vmatprep.subr.bf16.mxu0 0
  %108 = vmatpush2.bf16.msra.mxu0 0
  %109 = vmatprep.subr.bf16.mxu0 0
  %110 = vmatpush2.bf16.msra.mxu0 0
  %111 = vmatprep.subr.bf16.mxu0 0
  %112 = vmatpush2.bf16.msra.mxu0 0
  %113 = vmatprep.subr.bf16.mxu0 0
  %114 = vmatpush2.bf16.msra.mxu0 0
  %115 = vmatprep.subr.bf16.mxu0 0
  %116 = vmatpush2.bf16.msra.mxu0 0
  %117 = vmatprep.subr.bf16.mxu0 0
  %118 = vmatpush2.bf16.msra.mxu0 0
  %119 = vmatprep.subr.bf16.mxu0 0
  %120 = vmatpush2.bf16.msra.mxu0 0
  %121 = vmatprep.subr.bf16.mxu0 0
  %122 = vmatpush2.bf16.msra.mxu0 0
  %123 = vmatprep.mubr.bf16.mxu0 0
  %124 = vmatmul.mubr.bf16.gmra.mxu0 %v86
  %v125 = vpop.f32.mrf.mxu0
  %v126 = vadd.f32 %v76, %v125
  %v127 = vpop.f32.mrf.mxu0
  %v128 = vpop.f32.mrf.mxu0
  %v129 = vadd.f32 %v76, %v128
  %v130 = vpop.f32.mrf.mxu0
  %131 = vmatprep.mubr.bf16.mxu0 0
  %132 = vmatmul.mubr.bf16.gmra.mxu0 %v89
  %v133 = vpop.f32.mrf.mxu0
  %v134 = vadd.f32 %v76, %v133
  %v135 = vpop.f32.mrf.mxu0
  %v136 = vpop.f32.mrf.mxu0
  %v137 = vadd.f32 %v76, %v136
  %v138 = vpop.f32.mrf.mxu0
  %139 = vdwg.mxu0
  %v140 = vtanh.pop %v126
  %v141 = vtanh.pop %v129
  %v142 = vtanh.pop %v134
  %v143 = vtanh.pop %v137
  %v144 = vld [vmem:[%s7] sm:$0xf]
  %v145 = vld [vmem:[%s7 + $0x4] sm:$0xf]
  %v146 = vld [vmem:[%s7 + $0x8] sm:$0xf]
  %v147 = vld [vmem:[%s7 + $0xc] sm:$0xf]
  %v148 = vld [vmem:[%s7 + $0x10] sm:$0xf]
  %v149 = vld [vmem:[%s7 + $0x14] sm:$0xf]
  %v150 = vld [vmem:[%s7 + $0x18] sm:$0xf]
  %v151 = vld [vmem:[%s7 + $0x1c] sm:$0xf]
  %v152 = vld [vmem:[%s7 + $0x20] sm:$0xf]
  %v153 = vld [vmem:[%s7 + $0x24] sm:$0xf]
  %v154 = vld [vmem:[%s7 + $0x28] sm:$0xf]
  %v155 = vld [vmem:[%s7 + $0x2c] sm:$0xf]
  %v156 = vld [vmem:[%s7 + $0x30] sm:$0xf]
  %v157 = vld [vmem:[%s7 + $0x34] sm:$0xf]
  %v158 = vld [vmem:[%s7 + $0x38] sm:$0xf]
  %v159 = vld [vmem:[%s7 + $0x3c] sm:$0xf]
  %v160 = vld [vmem:[%s8] sm:$0x1]
  %v161 = vpack.c.bf16 %v141, %v140
  %v162 = vpack.c.bf16 %v143, %v142
  %v164 = vlaneseq
  %v165 = vshrl.u32 %v164, 7
  %v166 = vsub.s32 0, %v165
  %v167 = vrot.slane %v160, %v166
  %v185 = vunpack.c.l.b16 %v144
  %v186 = vunpack.c.l.b16 %v145
  %v187 = vunpack.c.l.b16 %v146
  %v188 = vunpack.c.l.b16 %v147
  %v189 = vunpack.c.l.b16 %v148
  %v190 = vunpack.c.l.b16 %v149
  %v191 = vunpack.c.l.b16 %v150
  %v192 = vunpack.c.l.b16 %v151
  %v193 = vunpack.c.l.b16 %v152
  %v194 = vunpack.c.l.b16 %v153
  %v195 = vunpack.c.l.b16 %v154
  %v196 = vunpack.c.l.b16 %v155
  %v197 = vunpack.c.l.b16 %v156
  %v198 = vunpack.c.l.b16 %v157
  %v199 = vunpack.c.l.b16 %v158
  %v200 = vunpack.c.l.b16 %v159
  %v201 = vpack.c.b16 %v186, %v185
  %v202 = vpack.c.b16 %v188, %v187
  %v203 = vpack.c.b16 %v190, %v189
  %v204 = vpack.c.b16 %v192, %v191
  %v205 = vpack.c.b16 %v194, %v193
  %v206 = vpack.c.b16 %v196, %v195
  %v207 = vpack.c.b16 %v198, %v197
  %v208 = vpack.c.b16 %v200, %v199
  %217 = vmatprep.subr.bf16.mxu0 0
  %218 = vmatpush1.bf16.msra.mxu0 %v208
  %219 = vmatprep.subr.bf16.mxu0 0
  %220 = vmatpush1.bf16.msra.mxu0 %v207
  %221 = vmatprep.subr.bf16.mxu0 0
  %222 = vmatpush1.bf16.msra.mxu0 %v206
  %223 = vmatprep.subr.bf16.mxu0 0
  %224 = vmatpush1.bf16.msra.mxu0 %v205
  %225 = vmatprep.subr.bf16.mxu0 0
  %226 = vmatpush1.bf16.msra.mxu0 %v204
  %227 = vmatprep.subr.bf16.mxu0 0
  %228 = vmatpush1.bf16.msra.mxu0 %v203
  %229 = vmatprep.subr.bf16.mxu0 0
  %230 = vmatpush1.bf16.msra.mxu0 %v202
  %231 = vmatprep.subr.bf16.mxu0 0
  %232 = vmatpush1.bf16.msra.mxu0 %v201
  %233 = vmatprep.subr.bf16.mxu0 0
  %234 = vmatpush2.bf16.msra.mxu0 0
  %235 = vmatprep.subr.bf16.mxu0 0
  %236 = vmatpush2.bf16.msra.mxu0 0
  %237 = vmatprep.subr.bf16.mxu0 0
  %238 = vmatpush2.bf16.msra.mxu0 0
  %239 = vmatprep.subr.bf16.mxu0 0
  %240 = vmatpush2.bf16.msra.mxu0 0
  %241 = vmatprep.subr.bf16.mxu0 0
  %242 = vmatpush2.bf16.msra.mxu0 0
  %243 = vmatprep.subr.bf16.mxu0 0
  %244 = vmatpush2.bf16.msra.mxu0 0
  %245 = vmatprep.subr.bf16.mxu0 0
  %246 = vmatpush2.bf16.msra.mxu0 0
  %247 = vmatprep.subr.bf16.mxu0 0
  %248 = vmatpush2.bf16.msra.mxu0 0
  %249 = vmatprep.mubr.bf16.mxu0 0
  %250 = vmatmul.mubr.bf16.gmra.mxu0 %v161
  %v251 = vpop.f32.mrf.mxu0
  %v252 = vadd.f32 %v167, %v251
  %v253 = vpop.f32.mrf.mxu0
  %v254 = vpop.f32.mrf.mxu0
  %v255 = vadd.f32 %v167, %v254
  %v256 = vpop.f32.mrf.mxu0
  %257 = vmatprep.mubr.bf16.mxu0 0
  %258 = vmatmul.mubr.bf16.gmra.mxu0 %v162
  %v259 = vpop.f32.mrf.mxu0
  %v260 = vadd.f32 %v167, %v259
  %v261 = vpop.f32.mrf.mxu0
  %v262 = vpop.f32.mrf.mxu0
  %v263 = vadd.f32 %v167, %v262
  %v264 = vpop.f32.mrf.mxu0
  %265 = vdwg.mxu0
  %v266 = vtanh.pop %v252
  %v267 = vtanh.pop %v255
  %v268 = vtanh.pop %v260
  %v269 = vtanh.pop %v263
  %v270 = vld [vmem:[%s9] sm:$0xf]
  %v271 = vld [vmem:[%s9 + $0x4] sm:$0xf]
  %v272 = vld [vmem:[%s9 + $0x8] sm:$0xf]
  %v273 = vld [vmem:[%s9 + $0xc] sm:$0xf]
  %v274 = vld [vmem:[%s9 + $0x10] sm:$0xf]
  %v275 = vld [vmem:[%s9 + $0x14] sm:$0xf]
  %v276 = vld [vmem:[%s9 + $0x18] sm:$0xf]
  %v277 = vld [vmem:[%s9 + $0x1c] sm:$0xf]
  %v278 = vld [vmem:[%s9 + $0x20] sm:$0xf]
  %v279 = vld [vmem:[%s9 + $0x24] sm:$0xf]
  %v280 = vld [vmem:[%s9 + $0x28] sm:$0xf]
  %v281 = vld [vmem:[%s9 + $0x2c] sm:$0xf]
  %v282 = vld [vmem:[%s9 + $0x30] sm:$0xf]
  %v283 = vld [vmem:[%s9 + $0x34] sm:$0xf]
  %v284 = vld [vmem:[%s9 + $0x38] sm:$0xf]
  %v285 = vld [vmem:[%s9 + $0x3c] sm:$0xf]
  %v286 = vld [vmem:[%s10] sm:$0x1]
  %v287 = vpack.c.bf16 %v267, %v266
  %v288 = vpack.c.bf16 %v269, %v268
  %v290 = vlaneseq
  %v291 = vshrl.u32 %v290, 7
  %v292 = vsub.s32 0, %v291
  %v293 = vrot.slane %v286, %v292
  %v311 = vunpack.c.l.b16 %v270
  %v312 = vunpack.c.l.b16 %v271
  %v313 = vunpack.c.l.b16 %v272
  %v314 = vunpack.c.l.b16 %v273
  %v315 = vunpack.c.l.b16 %v274
  %v316 = vunpack.c.l.b16 %v275
  %v317 = vunpack.c.l.b16 %v276
  %v318 = vunpack.c.l.b16 %v277
  %v319 = vunpack.c.l.b16 %v278
  %v320 = vunpack.c.l.b16 %v279
  %v321 = vunpack.c.l.b16 %v280
  %v322 = vunpack.c.l.b16 %v281
  %v323 = vunpack.c.l.b16 %v282
  %v324 = vunpack.c.l.b16 %v283
  %v325 = vunpack.c.l.b16 %v284
  %v326 = vunpack.c.l.b16 %v285
  %v327 = vpack.c.b16 %v312, %v311
  %v328 = vpack.c.b16 %v314, %v313
  %v329 = vpack.c.b16 %v316, %v315
  %v330 = vpack.c.b16 %v318, %v317
  %v331 = vpack.c.b16 %v320, %v319
  %v332 = vpack.c.b16 %v322, %v321
  %v333 = vpack.c.b16 %v324, %v323
  %v334 = vpack.c.b16 %v326, %v325
  %343 = vmatprep.subr.bf16.mxu0 0
  %344 = vmatpush1.bf16.msra.mxu0 %v334
  %345 = vmatprep.subr.bf16.mxu0 0
  %346 = vmatpush1.bf16.msra.mxu0 %v333
  %347 = vmatprep.subr.bf16.mxu0 0
  %348 = vmatpush1.bf16.msra.mxu0 %v332
  %349 = vmatprep.subr.bf16.mxu0 0
  %350 = vmatpush1.bf16.msra.mxu0 %v331
  %351 = vmatprep.subr.bf16.mxu0 0
  %352 = vmatpush1.bf16.msra.mxu0 %v330
  %353 = vmatprep.subr.bf16.mxu0 0
  %354 = vmatpush1.bf16.msra.mxu0 %v329
  %355 = vmatprep.subr.bf16.mxu0 0
  %356 = vmatpush1.bf16.msra.mxu0 %v328
  %357 = vmatprep.subr.bf16.mxu0 0
  %358 = vmatpush1.bf16.msra.mxu0 %v327
  %359 = vmatprep.subr.bf16.mxu0 0
  %360 = vmatpush2.bf16.msra.mxu0 0
  %361 = vmatprep.subr.bf16.mxu0 0
  %362 = vmatpush2.bf16.msra.mxu0 0
  %363 = vmatprep.subr.bf16.mxu0 0
  %364 = vmatpush2.bf16.msra.mxu0 0
  %365 = vmatprep.subr.bf16.mxu0 0
  %366 = vmatpush2.bf16.msra.mxu0 0
  %367 = vmatprep.subr.bf16.mxu0 0
  %368 = vmatpush2.bf16.msra.mxu0 0
  %369 = vmatprep.subr.bf16.mxu0 0
  %370 = vmatpush2.bf16.msra.mxu0 0
  %371 = vmatprep.subr.bf16.mxu0 0
  %372 = vmatpush2.bf16.msra.mxu0 0
  %373 = vmatprep.subr.bf16.mxu0 0
  %374 = vmatpush2.bf16.msra.mxu0 0
  %375 = vmatprep.mubr.bf16.mxu0 0
  %376 = vmatmul.mubr.bf16.gmra.mxu0 %v287
  %v377 = vpop.f32.mrf.mxu0
  %v378 = vadd.f32 %v293, %v377
  %v379 = vpop.f32.mrf.mxu0
  %v380 = vpop.f32.mrf.mxu0
  %v381 = vadd.f32 %v293, %v380
  %v382 = vpop.f32.mrf.mxu0
  %383 = vmatprep.mubr.bf16.mxu0 0
  %384 = vmatmul.mubr.bf16.gmra.mxu0 %v288
  %v385 = vpop.f32.mrf.mxu0
  %v386 = vadd.f32 %v293, %v385
  %v387 = vpop.f32.mrf.mxu0
  %v388 = vpop.f32.mrf.mxu0
  %v389 = vadd.f32 %v293, %v388
  %v390 = vpop.f32.mrf.mxu0
  %391 = vdwg.mxu0
  %v393 = vlaneseq
  %v394 = vshrl.u32 %v393, 7
  %v395 = vsub.s32 0, %v394
  %v396 = vrot.slane %v42, %v395
  %v398 = vmul.f32 %v378, %v396
  %v399 = vmul.f32 %v381, %v396
  %v400 = vmul.f32 %v386, %v396
  %v401 = vmul.f32 %v389, %v396
  %v403 = vlaneseq
  %v404 = vshrl.u32 %v403, 7
  %v405 = vsub.s32 0, %v404
  %v406 = vrot.slane %v41, %v405
  %v408 = vadd.f32 %v398, %v406
  %v409 = vadd.f32 %v399, %v406
  %v410 = vadd.f32 %v400, %v406
  %v411 = vadd.f32 %v401, %v406
  %vm412 = vcmask 64512
  %413 = vst.msk [vmem:[%s11] sm:$0xff] %vm412, %v408
  %414 = vst.msk [vmem:[%s11 + $0x8] sm:$0xff] %vm412, %v409
  %415 = vst.msk [vmem:[%s11 + $0x10] sm:$0xff] %vm412, %v410
  %416 = vst.msk [vmem:[%s11 + $0x18] sm:$0xff] %vm412, %v411
  // Predicated region
  $region46: #{tpu_custom_call.1} parent=0 // pred_check
    _
  $region47: #{tpu_custom_call.1} parent=0 // pred_check_branch
    %418 = sbr.rel (0) target = $region49
  $region48: #{tpu_custom_call.1} parent=0 // pred_region
    _
  $region49: #{tpu_custom_call.1} parent=0 // pred_fallthru
    _
  // Predicated region
  $region50: #{tpu_custom_call.1} parent=0 // pred_check
    _
  $region51: #{tpu_custom_call.1} parent=0 // pred_check_branch
    %420 = sbr.rel (0) target = $region53
  $region52: #{tpu_custom_call.1} parent=0 // pred_region
    _
  $region53: #{tpu_custom_call.1} parent=0 // pred_fallthru
    _

</llo_original>
